<compile_context>
chip_gen: v7x
topology: tpu7x:2x2x1
jax: 0.10.0
libtpu: 0.0.40
codegen_flags: <defaults>
</compile_context>

<pallas_src>
import functools
import math

import jax
import jax.numpy as jnp
from jax.experimental import pallas as pl
from jax.experimental.pallas import tpu as pltpu

_INV_SQRT2 = 1.0 / math.sqrt(2.0)


def _gelu_exact(x):
    # Matches torch.nn.GELU() default (erf-based, not tanh approximation).
    return 0.5 * x * (1.0 + jax.lax.erf(x * _INV_SQRT2))


def _round_up(x, m):
    return (x + m - 1) // m * m


# --------------------------------------------------------------------------
# Kernel
# --------------------------------------------------------------------------
def _ffn_kernel(x_ref, w1_ref, b1_ref, w2_ref, b2_ref, o_ref, acc_ref, *,
                th, n_chunks):
    # x_ref : (tm, Dp) f32/bf16   w1_ref: (Dp, Hp) bf16   b1_ref: (1, Hp) f32
    # w2_ref: (Hp, Dp) bf16       b2_ref: (1, Dp)  f32    o_ref : (tm, Dp)
    # acc_ref: (tm, Dp) f32 scratch
    x = x_ref[...].astype(jnp.bfloat16)
    for c in range(n_chunks):  # static unroll over hidden-dim chunks
        off = c * th
        h = jnp.dot(x, w1_ref[:, pl.ds(off, th)],
                    preferred_element_type=jnp.float32)
        h = _gelu_exact(h + b1_ref[:, pl.ds(off, th)]).astype(jnp.bfloat16)
        contrib = jnp.dot(h, w2_ref[pl.ds(off, th), :],
                          preferred_element_type=jnp.float32)
        if n_chunks == 1:
            o_ref[...] = (contrib + b2_ref[...]).astype(o_ref.dtype)
        elif c == 0:
            acc_ref[...] = contrib
        elif c < n_chunks - 1:
            acc_ref[...] += contrib
        else:
            o_ref[...] = (acc_ref[...] + contrib + b2_ref[...]).astype(o_ref.dtype)


# --------------------------------------------------------------------------
# One-time parameter packing (hoisted out of the per-call path)
# --------------------------------------------------------------------------
def pack_ffn_params(w1, b1, w2, b2, *, lane_mult=None):
    """torch-layout Linear params -> padded, bf16, kernel-layout params.

    w1: (H, D), b1: (H,)   -- nn.Linear(dim, hidden_dim)
    w2: (D, H), b2: (D,)   -- nn.Linear(hidden_dim, dim)
    """
    H, D = w1.shape
    assert w2.shape == (D, H) and b1.shape == (H,) and b2.shape == (D,)
    if lane_mult is None:
        # 256-wide MXU passes on v6e/v7x; keep 128 when dims are tiny so the
        # relative padding overhead stays small (v5e MXU is 128-wide anyway).
        lane_mult = 256 if min(D, H) >= 256 else 128
    Dp = _round_up(D, lane_mult)
    Hp = _round_up(H, lane_mult)
    bf16, f32 = jnp.bfloat16, jnp.float32
    w1_p = jnp.zeros((Dp, Hp), bf16).at[:D, :H].set(w1.T.astype(bf16))
    w2_p = jnp.zeros((Hp, Dp), bf16).at[:H, :D].set(w2.T.astype(bf16))
    b1_p = jnp.zeros((1, Hp), f32).at[0, :H].set(b1.astype(f32))
    b2_p = jnp.zeros((1, Dp), f32).at[0, :D].set(b2.astype(f32))
    # Padding is exact: gelu(0 + 0) = 0 and padded W2 rows/cols are zero, so
    # padded lanes contribute nothing; the wrapper slices [:B, :D] at the end.
    return dict(w1=w1_p, b1=b1_p, w2=w2_p, b2=b2_p, D=D, H=H, Dp=Dp, Hp=Hp)


# --------------------------------------------------------------------------
# VMEM budgeting / tile selection
# --------------------------------------------------------------------------
def _vmem_capacity_bytes():
    try:
        return int(pltpu.get_tpu_info().vmem_capacity_bytes)
    except Exception:
        return 64 * 2**20  # conservative: v7x per-TensorCore


def _vmem_need_bytes(tm, Dp, Hp, th, n_chunks):
    weights = 2 * Dp * Hp * 2                      # W1 + W2 bf16, Buffered(1)
    biases = 4 * (Hp + Dp)
    x_io = 2 * tm * Dp * 4 + 2 * tm * Dp * 4       # double-buffered x + out
    acc = tm * Dp * 4 if n_chunks > 1 else 0       # f32 accumulator scratch
    temps = tm * Dp * 2 + 2 * (tm * th * 4 + tm * th * 2)  # bf16 x + h temps
    return weights + biases + x_io + acc + temps


def _pick_th(Hp, th_max):
    if Hp <= th_max:
        return Hp
    for c in (512, 384, 256, 128):
        if c <= th_max and Hp % c == 0:
            return c
    return 128  # Hp is always a multiple of 128


# --------------------------------------------------------------------------
# Forward wrapper
# --------------------------------------------------------------------------
def _make_ffn_call(tm, Mp, Dp, Hp, th, n_chunks, out_dtype, vmem_limit,
                   single_buffer_weights):
    def resident_spec(shape):
        idx = lambda i: (0,) * len(shape)
        if single_buffer_weights:
            return pl.BlockSpec(shape, idx, pipeline_mode=pl.Buffered(1))
        return pl.BlockSpec(shape, idx)

    kernel = functools.partial(_ffn_kernel, th=th, n_chunks=n_chunks)
    return pl.pallas_call(
        kernel,
        out_shape=jax.ShapeDtypeStruct((Mp, Dp), out_dtype),
        grid_spec=pltpu.PrefetchScalarGridSpec(
            num_scalar_prefetch=0,
            grid=(Mp // tm,),
            in_specs=[
                pl.BlockSpec((tm, Dp), lambda i: (i, 0)),  # streamed X tile
                resident_spec((Dp, Hp)),                   # resident W1 (bf16)
                resident_spec((1, Hp)),                    # resident b1
                resident_spec((Hp, Dp)),                   # resident W2 (bf16)
                resident_spec((1, Dp)),                    # resident b2
            ],
            out_specs=pl.BlockSpec((tm, Dp), lambda i: (i, 0)),
            scratch_shapes=[pltpu.VMEM((tm, Dp), jnp.float32)],
        ),
        compiler_params=pltpu.CompilerParams(
            dimension_semantics=("parallel",),  # megacore sharding on v7x
            vmem_limit_bytes=vmem_limit,
        ),
    )


def ffn_forward_packed(x, packed, *, tm_max=512, th_max=512, min_grid=4):
    """FFN forward with pre-packed params: GELU(x @ W1 + b1) @ W2 + b2."""
    B, D = x.shape
    assert D == packed["D"], (D, packed["D"])
    Dp, Hp = packed["Dp"], packed["Hp"]

    th = _pick_th(Hp, th_max)
    n_chunks = Hp // th

    # --- M tile: aim for >= min_grid grid steps, then shrink to fit VMEM ----
    rows = _round_up(B, 8)
    tm = max(8, min(tm_max, _round_up(-(-rows // min_grid), 8)))
    cap = _vmem_capacity_bytes()
    budget = cap - 6 * 2**20
    while tm > 8 and _vmem_need_bytes(tm, Dp, Hp, th, n_chunks) > budget:
        tm = max(8, _round_up(tm // 2, 8))
    need = _vmem_need_bytes(tm, Dp, Hp, th, n_chunks)
    if need > budget:
        raise ValueError(
            f"FFN weights too large for resident-weight kernel "
            f"(need ~{need >> 20} MiB, budget {budget >> 20} MiB); "
            f"H-streaming fallback not implemented.")
    vmem_limit = int(min(cap - 4 * 2**20, max(need * 3 // 2, 32 * 2**20)))

    Mp = _round_up(B, tm)
    if (Mp, Dp) == (B, D):
        x_p = x
    else:
        x_p = jnp.zeros((Mp, Dp), x.dtype).at[:B, :D].set(x)

    args = (x_p, packed["w1"], packed["b1"], packed["w2"], packed["b2"])
    try:
        out_p = _make_ffn_call(tm, Mp, Dp, Hp, th, n_chunks, x.dtype,
                               vmem_limit, single_buffer_weights=True)(*args)
    except Exception:
        # Fallback for environments where pipeline_mode=pl.Buffered(1) on a
        # constant-index BlockSpec is not supported.
        out_p = _make_ffn_call(tm, Mp, Dp, Hp, th, n_chunks, x.dtype,
                               vmem_limit, single_buffer_weights=False)(*args)

    if (Mp, Dp) == (B, D):
        return out_p
    return out_p[:B, :D]


def ffn_forward(x, w1, b1, w2, b2):
    """Convenience wrapper: packs params then runs the kernel (x: (B, D))."""
    return ffn_forward_packed(x, pack_ffn_params(w1, b1, w2, b2))


# --------------------------------------------------------------------------
# Self-test
# --------------------------------------------------------------------------
if __name__ == "__main__":
    # Small config consistent with the module: (B, D) -> (B, D)
    B, dim, hidden_dim = 2, 32, 64

    key = jax.random.PRNGKey(0)
    kx, kw1, kb1, kw2, kb2 = jax.random.split(key, 5)

    x = jax.random.normal(kx, (B, dim), dtype=jnp.float32)

    # Deterministic init mimicking torch.nn.Linear default: U(-1/sqrt(in), ...)
    bound1 = 1.0 / math.sqrt(dim)
    w1 = jax.random.uniform(kw1, (hidden_dim, dim), jnp.float32, -bound1, bound1)
    b1 = jax.random.uniform(kb1, (hidden_dim,), jnp.float32, -bound1, bound1)
    bound2 = 1.0 / math.sqrt(hidden_dim)
    w2 = jax.random.uniform(kw2, (dim, hidden_dim), jnp.float32, -bound2, bound2)
    b2 = jax.random.uniform(kb2, (dim,), jnp.float32, -bound2, bound2)

    packed = pack_ffn_params(w1, b1, w2, b2)      # one-time host-side pack
    out = jax.block_until_ready(ffn_forward_packed(x, packed))

    # Pure-JAX f32 reference (exact erf GELU, dropout p=0 -> identity)
    h_ref = x @ w1.T + b1
    h_ref = 0.5 * h_ref * (1.0 + jax.lax.erf(h_ref * _INV_SQRT2))
    ref = h_ref @ w2.T + b2

    assert out.shape == (B, dim)
    # bf16 MXU operands (f32 accumulation) -> relaxed tolerance vs f32 ref.
    err = float(jnp.max(jnp.abs(out - ref)))
    assert jnp.allclose(out, ref, atol=2e-2, rtol=2e-2), err

    print("KERNEL_OK")
</pallas_src>

<mosaic_0001>
module attributes {stable_mosaic.version = 11 : i64} {
  func.func @_ffn_kernel(%arg0: i32, %arg1: memref<8x128xf32, #tpu.memory_space<vmem>>, %arg2: memref<128x128xbf16, #tpu.memory_space<vmem>>, %arg3: memref<1x128xf32, #tpu.memory_space<vmem>>, %arg4: memref<128x128xbf16, #tpu.memory_space<vmem>>, %arg5: memref<1x128xf32, #tpu.memory_space<vmem>>, %arg6: memref<8x128xf32, #tpu.memory_space<vmem>>, %arg7: memref<8x128xf32, #tpu.memory_space<vmem>>) attributes {dimension_semantics = [#tpu.dimension_semantics<parallel>], iteration_bounds = array<i64: 1>, scalar_prefetch = 0 : i64, scratch_operands = 1 : i64, tpu.core_type = #tpu.core_type<tc>, window_params = [{transform_indices = @transform_0, window_bounds = array<i64: 8, 128>}, {pipeline_mode = #tpu.pipeline_mode<synchronous>, transform_indices = @transform_1, window_bounds = array<i64: 128, 128>}, {pipeline_mode = #tpu.pipeline_mode<synchronous>, transform_indices = @transform_2, window_bounds = array<i64: 1, 128>}, {pipeline_mode = #tpu.pipeline_mode<synchronous>, transform_indices = @transform_3, window_bounds = array<i64: 128, 128>}, {pipeline_mode = #tpu.pipeline_mode<synchronous>, transform_indices = @transform_4, window_bounds = array<i64: 1, 128>}, {transform_indices = @transform_5, window_bounds = array<i64: 8, 128>}]} {
    %c0 = arith.constant 0 : index
    %c0_0 = arith.constant 0 : index
    %0 = vector.load %arg1[%c0, %c0_0] : memref<8x128xf32, #tpu.memory_space<vmem>>, vector<8x128xf32>
    %1 = arith.truncf %0 : vector<8x128xf32> to vector<8x128xbf16>
    %c0_1 = arith.constant 0 : index
    %c0_2 = arith.constant 0 : index
    %2 = vector.load %arg2[%c0_1, %c0_2] : memref<128x128xbf16, #tpu.memory_space<vmem>>, vector<128x128xbf16>
    %cst = arith.constant dense<0.000000e+00> : vector<8x128xf32>
    %3 = tpu.matmul %1, %2, %cst {dimension_numbers = #tpu.dot_dimension_numbers<[1], [0], [0], [1], [0, 0, 1, 1], [], []>} : vector<8x128xbf16>, vector<128x128xbf16>, vector<8x128xf32> -> vector<8x128xf32>
    %c0_3 = arith.constant 0 : index
    %c0_4 = arith.constant 0 : index
    %4 = vector.load %arg3[%c0_3, %c0_4] : memref<1x128xf32, #tpu.memory_space<vmem>>, vector<1x128xf32>
    %5 = vector.broadcast %4 : vector<1x128xf32> to vector<8x128xf32>
    %6 = arith.addf %3, %5 : vector<8x128xf32>
    %cst_5 = arith.constant 5.000000e-01 : f32
    %7 = vector.broadcast %cst_5 : f32 to vector<8x128xf32>
    %8 = arith.mulf %7, %6 : vector<8x128xf32>
    %cst_6 = arith.constant 0.707106769 : f32
    %9 = vector.broadcast %cst_6 : f32 to vector<8x128xf32>
    %10 = arith.mulf %6, %9 : vector<8x128xf32>
    %11 = math.erf %10 : vector<8x128xf32>
    %cst_7 = arith.constant 1.000000e+00 : f32
    %12 = vector.broadcast %cst_7 : f32 to vector<8x128xf32>
    %13 = arith.addf %12, %11 : vector<8x128xf32>
    %14 = arith.mulf %8, %13 : vector<8x128xf32>
    %15 = arith.truncf %14 : vector<8x128xf32> to vector<8x128xbf16>
    %c0_8 = arith.constant 0 : index
    %c0_9 = arith.constant 0 : index
    %16 = vector.load %arg4[%c0_8, %c0_9] : memref<128x128xbf16, #tpu.memory_space<vmem>>, vector<128x128xbf16>
    %cst_10 = arith.constant dense<0.000000e+00> : vector<8x128xf32>
    %17 = tpu.matmul %15, %16, %cst_10 {dimension_numbers = #tpu.dot_dimension_numbers<[1], [0], [0], [1], [0, 0, 1, 1], [], []>} : vector<8x128xbf16>, vector<128x128xbf16>, vector<8x128xf32> -> vector<8x128xf32>
    %c0_11 = arith.constant 0 : index
    %c0_12 = arith.constant 0 : index
    %18 = vector.load %arg5[%c0_11, %c0_12] : memref<1x128xf32, #tpu.memory_space<vmem>>, vector<1x128xf32>
    %19 = vector.broadcast %18 : vector<1x128xf32> to vector<8x128xf32>
    %20 = arith.addf %17, %19 : vector<8x128xf32>
    %c0_13 = arith.constant 0 : index
    %c0_14 = arith.constant 0 : index
    %21 = vector.load %arg6[%c0_13, %c0_14] : memref<8x128xf32, #tpu.memory_space<vmem>>, vector<8x128xf32>
    tpu.vector_store %arg6[%c0_13, %c0_14], %20 {strides = array<i32>} : memref<8x128xf32, #tpu.memory_space<vmem>>, vector<8x128xf32>,
    return
  }
  func.func @transform_0(%arg0: i32) -> (i32, i32) {
    %c0_i32 = arith.constant 0 : i32
    %c0_i32_0 = arith.constant 0 : i32
    return %arg0, %c0_i32 : i32, i32
  }
  func.func @transform_1(%arg0: i32) -> (i32, i32) {
    %c0_i32 = arith.constant 0 : i32
    %c0_i32_0 = arith.constant 0 : i32
    %c0_i32_1 = arith.constant 0 : i32
    return %c0_i32, %c0_i32_0 : i32, i32
  }
  func.func @transform_2(%arg0: i32) -> (i32, i32) {
    %c0_i32 = arith.constant 0 : i32
    %c0_i32_0 = arith.constant 0 : i32
    %c0_i32_1 = arith.constant 0 : i32
    return %c0_i32, %c0_i32_0 : i32, i32
  }
  func.func @transform_3(%arg0: i32) -> (i32, i32) {
    %c0_i32 = arith.constant 0 : i32
    %c0_i32_0 = arith.constant 0 : i32
    %c0_i32_1 = arith.constant 0 : i32
    return %c0_i32, %c0_i32_0 : i32, i32
  }
  func.func @transform_4(%arg0: i32) -> (i32, i32) {
    %c0_i32 = arith.constant 0 : i32
    %c0_i32_0 = arith.constant 0 : i32
    %c0_i32_1 = arith.constant 0 : i32
    return %c0_i32, %c0_i32_0 : i32, i32
  }
  func.func @transform_5(%arg0: i32) -> (i32, i32) {
    %c0_i32 = arith.constant 0 : i32
    %c0_i32_0 = arith.constant 0 : i32
    return %arg0, %c0_i32 : i32, i32
  }
}

module attributes {stable_mosaic.version = 11 : i64} {
  func.func @_ffn_kernel(%arg0: i32, %arg1: memref<8x128xf32, #tpu.memory_space<vmem>>, %arg2: memref<128x128xbf16, #tpu.memory_space<vmem>>, %arg3: memref<1x128xf32, #tpu.memory_space<vmem>>, %arg4: memref<128x128xbf16, #tpu.memory_space<vmem>>, %arg5: memref<1x128xf32, #tpu.memory_space<vmem>>, %arg6: memref<8x128xf32, #tpu.memory_space<vmem>>, %arg7: memref<8x128xf32, #tpu.memory_space<vmem>>) attributes {dimension_semantics = [#tpu.dimension_semantics<parallel>], iteration_bounds = array<i64: 1>, scalar_prefetch = 0 : i64, scratch_operands = 1 : i64, tpu.core_type = #tpu.core_type<tc>, window_params = [{transform_indices = @transform_0, window_bounds = array<i64: 8, 128>}, {pipeline_mode = #tpu.pipeline_mode<synchronous>, transform_indices = @transform_1, window_bounds = array<i64: 128, 128>}, {pipeline_mode = #tpu.pipeline_mode<synchronous>, transform_indices = @transform_2, window_bounds = array<i64: 1, 128>}, {pipeline_mode = #tpu.pipeline_mode<synchronous>, transform_indices = @transform_3, window_bounds = array<i64: 128, 128>}, {pipeline_mode = #tpu.pipeline_mode<synchronous>, transform_indices = @transform_4, window_bounds = array<i64: 1, 128>}, {transform_indices = @transform_5, window_bounds = array<i64: 8, 128>}]} {
    %c0 = arith.constant 0 : index
    %c0_0 = arith.constant 0 : index
    %0 = vector.load %arg1[%c0, %c0_0] : memref<8x128xf32, #tpu.memory_space<vmem>>, vector<8x128xf32>
    %1 = arith.truncf %0 : vector<8x128xf32> to vector<8x128xbf16>
    %c0_1 = arith.constant 0 : index
    %c0_2 = arith.constant 0 : index
    %2 = vector.load %arg2[%c0_1, %c0_2] : memref<128x128xbf16, #tpu.memory_space<vmem>>, vector<128x128xbf16>
    %cst = arith.constant dense<0.000000e+00> : vector<8x128xf32>
    %3 = tpu.matmul %1, %2, %cst {dimension_numbers = #tpu.dot_dimension_numbers<[1], [0], [0], [1], [0, 0, 1, 1], [], []>} : vector<8x128xbf16>, vector<128x128xbf16>, vector<8x128xf32> -> vector<8x128xf32>
    %c0_3 = arith.constant 0 : index
    %c0_4 = arith.constant 0 : index
    %4 = vector.load %arg3[%c0_3, %c0_4] : memref<1x128xf32, #tpu.memory_space<vmem>>, vector<1x128xf32>
    %5 = vector.broadcast %4 : vector<1x128xf32> to vector<8x128xf32>
    %6 = arith.addf %3, %5 : vector<8x128xf32>
    %cst_5 = arith.constant 5.000000e-01 : f32
    %7 = vector.broadcast %cst_5 : f32 to vector<8x128xf32>
    %8 = arith.mulf %7, %6 : vector<8x128xf32>
    %cst_6 = arith.constant 0.707106769 : f32
    %9 = vector.broadcast %cst_6 : f32 to vector<8x128xf32>
    %10 = arith.mulf %6, %9 : vector<8x128xf32>
    %11 = math.erf %10 : vector<8x128xf32>
    %cst_7 = arith.constant 1.000000e+00 : f32
    %12 = vector.broadcast %cst_7 : f32 to vector<8x128xf32>
    %13 = arith.addf %12, %11 : vector<8x128xf32>
    %14 = arith.mulf %8, %13 : vector<8x128xf32>
    %15 = arith.truncf %14 : vector<8x128xf32> to vector<8x128xbf16>
    %c0_8 = arith.constant 0 : index
    %c0_9 = arith.constant 0 : index
    %16 = vector.load %arg4[%c0_8, %c0_9] : memref<128x128xbf16, #tpu.memory_space<vmem>>, vector<128x128xbf16>
    %cst_10 = arith.constant dense<0.000000e+00> : vector<8x128xf32>
    %17 = tpu.matmul %15, %16, %cst_10 {dimension_numbers = #tpu.dot_dimension_numbers<[1], [0], [0], [1], [0, 0, 1, 1], [], []>} : vector<8x128xbf16>, vector<128x128xbf16>, vector<8x128xf32> -> vector<8x128xf32>
    %c0_11 = arith.constant 0 : index
    %c0_12 = arith.constant 0 : index
    %18 = vector.load %arg5[%c0_11, %c0_12] : memref<1x128xf32, #tpu.memory_space<vmem>>, vector<1x128xf32>
    %19 = vector.broadcast %18 : vector<1x128xf32> to vector<8x128xf32>
    %20 = arith.addf %17, %19 : vector<8x128xf32>
    %c0_13 = arith.constant 0 : index
    %c0_14 = arith.constant 0 : index
    %21 = vector.load %arg6[%c0_13, %c0_14] : memref<8x128xf32, #tpu.memory_space<vmem>>, vector<8x128xf32>
    tpu.vector_store %arg6[%c0_13, %c0_14], %20 {strides = array<i32>} : memref<8x128xf32, #tpu.memory_space<vmem>>, vector<8x128xf32>,
    return
  }
  func.func @transform_0(%arg0: i32) -> (i32, i32) {
    %c0_i32 = arith.constant 0 : i32
    %c0_i32_0 = arith.constant 0 : i32
    return %arg0, %c0_i32 : i32, i32
  }
  func.func @transform_1(%arg0: i32) -> (i32, i32) {
    %c0_i32 = arith.constant 0 : i32
    %c0_i32_0 = arith.constant 0 : i32
    %c0_i32_1 = arith.constant 0 : i32
    return %c0_i32, %c0_i32_0 : i32, i32
  }
  func.func @transform_2(%arg0: i32) -> (i32, i32) {
    %c0_i32 = arith.constant 0 : i32
    %c0_i32_0 = arith.constant 0 : i32
    %c0_i32_1 = arith.constant 0 : i32
    return %c0_i32, %c0_i32_0 : i32, i32
  }
  func.func @transform_3(%arg0: i32) -> (i32, i32) {
    %c0_i32 = arith.constant 0 : i32
    %c0_i32_0 = arith.constant 0 : i32
    %c0_i32_1 = arith.constant 0 : i32
    return %c0_i32, %c0_i32_0 : i32, i32
  }
  func.func @transform_4(%arg0: i32) -> (i32, i32) {
    %c0_i32 = arith.constant 0 : i32
    %c0_i32_0 = arith.constant 0 : i32
    %c0_i32_1 = arith.constant 0 : i32
    return %c0_i32, %c0_i32_0 : i32, i32
  }
  func.func @transform_5(%arg0: i32) -> (i32, i32) {
    %c0_i32 = arith.constant 0 : i32
    %c0_i32_0 = arith.constant 0 : i32
    return %arg0, %c0_i32 : i32, i32
  }
}

</mosaic_0001>

<llo_original>
// kernel: tpu_custom_call.1
$region0: #{tpu_custom_call.1}
  #allocation0 [shape = 'u32[]', space=smem, size = 0x4, offset = 0x4, fixed_abs, tag = 'smem constant byte address 0x4 - core index']
  #allocation1 [shape = 'u32[144,128]{1,0:T(1,128)}', space=vmem, size = 0x12000, scoped, tag = 'internal scratch']
  #allocation2 [shape = 'f32[8,128]{1,0:T(8,128)}', space=vmem, size = 0x1000, scoped, tag = 'scratch operand']
  %s0 = inlined_call_operand.hbm [shape: f32[8,128], index: 0, kind: input, shape index: {}]
  %s1 = inlined_call_operand.hbm [shape: bf16[128,128], index: 1, kind: input, shape index: {}]
  %s2 = inlined_call_operand.vmem [shape: f32[1,128], index: 2, kind: input, shape index: {}]
  %s3 = inlined_call_operand.hbm [shape: bf16[128,128], index: 3, kind: input, shape index: {}]
  %s4 = inlined_call_operand.vmem [shape: f32[1,128], index: 4, kind: input, shape index: {}]
  %s5 = inlined_call_operand.hbm [shape: f32[8,128], index: 5, kind: output, shape index: {}]
  %s6 = sld [smem:[#allocation0]]
  $region42: #{tpu_custom_call.1} parent=0
    _
  %s8 = ssub.s32 1, %s6
  %s9 = scalar_select 0, %s8, %s6
  $region1: #{tpu_custom_call.1} parent=0
    #allocation3 [shape = 'u8[4096]{0}', space=vmem, size = 0x1000, scoped, tag = 'input window, operand 0, single buffered']
    #allocation4 [shape = 's32[1]{0}', space=sflag, size = 0x4, scoped, tag = 'scoped memory for tpu_custom_call.1']
    #allocation5 [shape = 's32[1]{0}', space=sflag, size = 0x4, scoped, tag = 'scoped memory for tpu_custom_call.1']
    #allocation6 [shape = 'u8[32768]{0}', space=vmem, size = 0x8000, scoped, tag = 'input window, operand 1, single buffered']
    #allocation7 [shape = 's32[1]{0}', space=sflag, size = 0x4, scoped, tag = 'scoped memory for tpu_custom_call.1']
    #allocation8 [shape = 'u8[32768]{0}', space=vmem, size = 0x8000, scoped, tag = 'input window, operand 3, single buffered']
    #allocation9 [shape = 'u8[4096]{0}', space=vmem, size = 0x1000, scoped, tag = 'output window, operand 0, single buffered']
    %10 = vsyncpa [#allocation4], 0
    %11 = vsyncpa [#allocation7], 0
    %12 = vsyncpa [#allocation5], 0
    // Predicated region
    $region2: #{tpu_custom_call.1} parent=1 // pred_check
      _
    $region3: #{tpu_custom_call.1} parent=1 // pred_check_branch
      %14 = sbr.rel (0) target = $region5
    $region4: #{tpu_custom_call.1} parent=1 // pred_region
      %s16 = ssub.s32 128, 128
      %17 = vsyncadd [#allocation4], %s16
      %s19 = sshll.u32 [#allocation3], 4
      %s20 = int_to_ptr.vmem [resolvable:$true] %s19
      %22 = dma.hbm_to_vmem [thread:$0]  %s0, 128, %s20, [#allocation4]
    $region5: #{tpu_custom_call.1} parent=1 // pred_fallthru
      _
    // Predicated region
    $region6: #{tpu_custom_call.1} parent=1 // pred_check
      _
    $region7: #{tpu_custom_call.1} parent=1 // pred_check_branch
      %24 = sbr.rel (0) target = $region9
    $region8: #{tpu_custom_call.1} parent=1 // pred_region
      %s26 = ssub.s32 1024, 1024
      %27 = vsyncadd [#allocation7], %s26
      %s28 = sshll.u32 [#allocation6], 4
      %s29 = int_to_ptr.vmem [resolvable:$true] %s28
      %34 = dma.hbm_to_vmem [thread:$0]  %s1, 1024, %s29, [#allocation7], 64, 64, 4
    $region9: #{tpu_custom_call.1} parent=1 // pred_fallthru
      _
    // Predicated region
    $region10: #{tpu_custom_call.1} parent=1 // pred_check
      _
    $region11: #{tpu_custom_call.1} parent=1 // pred_check_branch
      %36 = sbr.rel (0) target = $region13
    $region12: #{tpu_custom_call.1} parent=1 // pred_region
      _
    $region13: #{tpu_custom_call.1} parent=1 // pred_fallthru
      _
    // Predicated region
    $region14: #{tpu_custom_call.1} parent=1 // pred_check
      _
    $region15: #{tpu_custom_call.1} parent=1 // pred_check_branch
      %38 = sbr.rel (0) target = $region17
    $region16: #{tpu_custom_call.1} parent=1 // pred_region
      %s40 = ssub.s32 1024, 1024
      %41 = vsyncadd [#allocation7], %s40
      %s42 = sshll.u32 [#allocation8], 4
      %s43 = int_to_ptr.vmem [resolvable:$true] %s42
      %48 = dma.hbm_to_vmem [thread:$0]  %s3, 1024, %s43, [#allocation7], 64, 64, 4
    $region17: #{tpu_custom_call.1} parent=1 // pred_fallthru
      _
    // Predicated region
    $region18: #{tpu_custom_call.1} parent=1 // pred_check
      _
    $region19: #{tpu_custom_call.1} parent=1 // pred_check_branch
      %50 = sbr.rel (0) target = $region21
    $region20: #{tpu_custom_call.1} parent=1 // pred_region
      _
    $region21: #{tpu_custom_call.1} parent=1 // pred_fallthru
      _
    // Predicated region
    $region22: #{tpu_custom_call.1} parent=1 // pred_check
      _
    $region23: #{tpu_custom_call.1} parent=1 // pred_check_branch
      %52 = sbr.rel (0) target = $region25
    $region24: #{tpu_custom_call.1} parent=1 // pred_region
      %53 = dma.done [#allocation4], 128
    $region25: #{tpu_custom_call.1} parent=1 // pred_fallthru
      _
    // Predicated region
    $region26: #{tpu_custom_call.1} parent=1 // pred_check
      _
    $region27: #{tpu_custom_call.1} parent=1 // pred_check_branch
      %55 = sbr.rel (0) target = $region29
    $region28: #{tpu_custom_call.1} parent=1 // pred_region
      %56 = dma.done [#allocation7], 1024
    $region29: #{tpu_custom_call.1} parent=1 // pred_fallthru
      _
    // Predicated region
    $region30: #{tpu_custom_call.1} parent=1 // pred_check
      _
    $region31: #{tpu_custom_call.1} parent=1 // pred_check_branch
      %58 = sbr.rel (0) target = $region33
    $region32: #{tpu_custom_call.1} parent=1 // pred_region
      %59 = dma.done [#allocation7], 1024
    $region33: #{tpu_custom_call.1} parent=1 // pred_fallthru
      _
    %v61 = vld [vmem:[#allocation3] sm:$0xff]
    %v62 = vpack.c.bf16 %v61, %v61
    %v63 = vld [vmem:[#allocation6] sm:$0xf]
    %v64 = vld [vmem:[#allocation6 + $0x4] sm:$0xf]
    %v65 = vld [vmem:[#allocation6 + $0x8] sm:$0xf]
    %v66 = vld [vmem:[#allocation6 + $0xc] sm:$0xf]
    %v67 = vld [vmem:[#allocation6 + $0x10] sm:$0xf]
    %v68 = vld [vmem:[#allocation6 + $0x14] sm:$0xf]
    %v69 = vld [vmem:[#allocation6 + $0x18] sm:$0xf]
    %v70 = vld [vmem:[#allocation6 + $0x1c] sm:$0xf]
    %v71 = vld [vmem:[#allocation6 + $0x20] sm:$0xf]
    %v72 = vld [vmem:[#allocation6 + $0x24] sm:$0xf]
    %v73 = vld [vmem:[#allocation6 + $0x28] sm:$0xf]
    %v74 = vld [vmem:[#allocation6 + $0x2c] sm:$0xf]
    %v75 = vld [vmem:[#allocation6 + $0x30] sm:$0xf]
    %v76 = vld [vmem:[#allocation6 + $0x34] sm:$0xf]
    %v77 = vld [vmem:[#allocation6 + $0x38] sm:$0xf]
    %v78 = vld [vmem:[#allocation6 + $0x3c] sm:$0xf]
    %v79 = vld [vmem:[%s2] sm:$0x1]
    %v81 = vlaneseq
    %v82 = vshrl.u32 %v81, 7
    %v83 = vsub.s32 0, %v82
    %v84 = vrot.slane %v79, %v83
    %v102 = vunpack.c.l.b16 %v63
    %v103 = vunpack.c.l.b16 %v64
    %v104 = vunpack.c.l.b16 %v65
    %v105 = vunpack.c.l.b16 %v66
    %v106 = vunpack.c.l.b16 %v67
    %v107 = vunpack.c.l.b16 %v68
    %v108 = vunpack.c.l.b16 %v69
    %v109 = vunpack.c.l.b16 %v70
    %v110 = vunpack.c.l.b16 %v71
    %v111 = vunpack.c.l.b16 %v72
    %v112 = vunpack.c.l.b16 %v73
    %v113 = vunpack.c.l.b16 %v74
    %v114 = vunpack.c.l.b16 %v75
    %v115 = vunpack.c.l.b16 %v76
    %v116 = vunpack.c.l.b16 %v77
    %v117 = vunpack.c.l.b16 %v78
    %v118 = vpack.c.b16 %v103, %v102
    %v119 = vpack.c.b16 %v105, %v104
    %v120 = vpack.c.b16 %v107, %v106
    %v121 = vpack.c.b16 %v109, %v108
    %v122 = vpack.c.b16 %v111, %v110
    %v123 = vpack.c.b16 %v113, %v112
    %v124 = vpack.c.b16 %v115, %v114
    %v125 = vpack.c.b16 %v117, %v116
    %134 = vmatprep.subr.bf16.mxu0 0
    %135 = vmatpush1.bf16.msra.mxu0 %v118
    %136 = vmatprep.subr.bf16.mxu0 0
    %137 = vmatpush1.bf16.msra.mxu0 %v119
    %138 = vmatprep.subr.bf16.mxu0 0
    %139 = vmatpush1.bf16.msra.mxu0 %v120
    %140 = vmatprep.subr.bf16.mxu0 0
    %141 = vmatpush1.bf16.msra.mxu0 %v121
    %142 = vmatprep.subr.bf16.mxu0 0
    %143 = vmatpush1.bf16.msra.mxu0 %v122
    %144 = vmatprep.subr.bf16.mxu0 0
    %145 = vmatpush1.bf16.msra.mxu0 %v123
    %146 = vmatprep.subr.bf16.mxu0 0
    %147 = vmatpush1.bf16.msra.mxu0 %v124
    %148 = vmatprep.subr.bf16.mxu0 0
    %149 = vmatpush1.bf16.msra.mxu0 %v125
    %150 = vmatprep.subr.bf16.mxu0 0
    %151 = vmatpush1.bf16.msra.mxu0 0
    %152 = vmatprep.subr.bf16.mxu0 0
    %153 = vmatpush1.bf16.msra.mxu0 0
    %154 = vmatprep.subr.bf16.mxu0 0
    %155 = vmatpush1.bf16.msra.mxu0 0
    %156 = vmatprep.subr.bf16.mxu0 0
    %157 = vmatpush1.bf16.msra.mxu0 0
    %158 = vmatprep.subr.bf16.mxu0 0
    %159 = vmatpush1.bf16.msra.mxu0 0
    %160 = vmatprep.subr.bf16.mxu0 0
    %161 = vmatpush1.bf16.msra.mxu0 0
    %162 = vmatprep.subr.bf16.mxu0 0
    %163 = vmatpush1.bf16.msra.mxu0 0
    %164 = vmatprep.subr.bf16.mxu0 0
    %165 = vmatpush1.bf16.msra.mxu0 0
    %166 = vmatprep.mubr.bf16.mxu0 0
    %167 = vmatmul.mubr.bf16.gmra.mrb[0].mxu0 %v62
    %v168 = vpop.f32.mrb[0].mxu0
    %v169 = vadd.f32 %v84, %v168
    %v170 = vpop.f32.mrb[0].mxu0
    %v171 = vpop.f32.mrb[0].mxu0
    %v172 = vpop.f32.mrb[0].mxu0
    %173 = vdwg.mxu0
    %v174 = vmul.f32 %v169, 0.5
    %v175 = vmul.f32 %v169, 0.70710677
    %v176 = verf.f32.pop %v175
    %v177 = vadd.f32 %v176, 1.0
    %v178 = vmul.f32 %v174, %v177
    %v179 = vpack.c.bf16 %v178, %v178
    %v180 = vld [vmem:[#allocation8] sm:$0xf]
    %v181 = vld [vmem:[#allocation8 + $0x4] sm:$0xf]
    %v182 = vld [vmem:[#allocation8 + $0x8] sm:$0xf]
    %v183 = vld [vmem:[#allocation8 + $0xc] sm:$0xf]
    %v184 = vld [vmem:[#allocation8 + $0x10] sm:$0xf]
    %v185 = vld [vmem:[#allocation8 + $0x14] sm:$0xf]
    %v186 = vld [vmem:[#allocation8 + $0x18] sm:$0xf]
    %v187 = vld [vmem:[#allocation8 + $0x1c] sm:$0xf]
    %v188 = vld [vmem:[#allocation8 + $0x20] sm:$0xf]
    %v189 = vld [vmem:[#allocation8 + $0x24] sm:$0xf]
    %v190 = vld [vmem:[#allocation8 + $0x28] sm:$0xf]
    %v191 = vld [vmem:[#allocation8 + $0x2c] sm:$0xf]
    %v192 = vld [vmem:[#allocation8 + $0x30] sm:$0xf]
    %v193 = vld [vmem:[#allocation8 + $0x34] sm:$0xf]
    %v194 = vld [vmem:[#allocation8 + $0x38] sm:$0xf]
    %v195 = vld [vmem:[#allocation8 + $0x3c] sm:$0xf]
    %v196 = vld [vmem:[%s4] sm:$0x1]
    %v198 = vlaneseq
    %v199 = vshrl.u32 %v198, 7
    %v200 = vsub.s32 0, %v199
    %v201 = vrot.slane %v196, %v200
    %v219 = vunpack.c.l.b16 %v180
    %v220 = vunpack.c.l.b16 %v181
    %v221 = vunpack.c.l.b16 %v182
    %v222 = vunpack.c.l.b16 %v183
    %v223 = vunpack.c.l.b16 %v184
    %v224 = vunpack.c.l.b16 %v185
    %v225 = vunpack.c.l.b16 %v186
    %v226 = vunpack.c.l.b16 %v187
    %v227 = vunpack.c.l.b16 %v188
    %v228 = vunpack.c.l.b16 %v189
    %v229 = vunpack.c.l.b16 %v190
    %v230 = vunpack.c.l.b16 %v191
    %v231 = vunpack.c.l.b16 %v192
    %v232 = vunpack.c.l.b16 %v193
    %v233 = vunpack.c.l.b16 %v194
    %v234 = vunpack.c.l.b16 %v195
    %v235 = vpack.c.b16 %v220, %v219
    %v236 = vpack.c.b16 %v222, %v221
    %v237 = vpack.c.b16 %v224, %v223
    %v238 = vpack.c.b16 %v226, %v225
    %v239 = vpack.c.b16 %v228, %v227
    %v240 = vpack.c.b16 %v230, %v229
    %v241 = vpack.c.b16 %v232, %v231
    %v242 = vpack.c.b16 %v234, %v233
    %251 = vmatprep.subr.bf16.mxu0 0
    %252 = vmatpush1.bf16.msra.mxu0 %v235
    %253 = vmatprep.subr.bf16.mxu0 0
    %254 = vmatpush1.bf16.msra.mxu0 %v236
    %255 = vmatprep.subr.bf16.mxu0 0
    %256 = vmatpush1.bf16.msra.mxu0 %v237
    %257 = vmatprep.subr.bf16.mxu0 0
    %258 = vmatpush1.bf16.msra.mxu0 %v238
    %259 = vmatprep.subr.bf16.mxu0 0
    %260 = vmatpush1.bf16.msra.mxu0 %v239
    %261 = vmatprep.subr.bf16.mxu0 0
    %262 = vmatpush1.bf16.msra.mxu0 %v240
    %263 = vmatprep.subr.bf16.mxu0 0
    %264 = vmatpush1.bf16.msra.mxu0 %v241
    %265 = vmatprep.subr.bf16.mxu0 0
    %266 = vmatpush1.bf16.msra.mxu0 %v242
    %267 = vmatprep.subr.bf16.mxu0 0
    %268 = vmatpush1.bf16.msra.mxu0 0
    %269 = vmatprep.subr.bf16.mxu0 0
    %270 = vmatpush1.bf16.msra.mxu0 0
    %271 = vmatprep.subr.bf16.mxu0 0
    %272 = vmatpush1.bf16.msra.mxu0 0
    %273 = vmatprep.subr.bf16.mxu0 0
    %274 = vmatpush1.bf16.msra.mxu0 0
    %275 = vmatprep.subr.bf16.mxu0 0
    %276 = vmatpush1.bf16.msra.mxu0 0
    %277 = vmatprep.subr.bf16.mxu0 0
    %278 = vmatpush1.bf16.msra.mxu0 0
    %279 = vmatprep.subr.bf16.mxu0 0
    %280 = vmatpush1.bf16.msra.mxu0 0
    %281 = vmatprep.subr.bf16.mxu0 0
    %282 = vmatpush1.bf16.msra.mxu0 0
    %283 = vmatprep.mubr.bf16.mxu0 0
    %284 = vmatmul.mubr.bf16.gmra.mrb[0].mxu0 %v179
    %v285 = vpop.f32.mrb[0].mxu0
    %v286 = vadd.f32 %v201, %v285
    %v287 = vpop.f32.mrb[0].mxu0
    %v288 = vpop.f32.mrb[0].mxu0
    %v289 = vpop.f32.mrb[0].mxu0
    %290 = vdwg.mxu0
    %291 = vst [vmem:[#allocation9] sm:$0xff] %v286
    // Predicated region
    $region34: #{tpu_custom_call.1} parent=1 // pred_check
      _
    $region35: #{tpu_custom_call.1} parent=1 // pred_check_branch
      %293 = sbr.rel (0) target = $region37
    $region36: #{tpu_custom_call.1} parent=1 // pred_region
      %s295 = ssub.s32 128, 128
      %296 = vsyncadd [#allocation5], %s295
      %s298 = sshll.u32 [#allocation9], 4
      %s299 = int_to_ptr.vmem [resolvable:$true] %s298
      %301 = dma.vmem_to_hbm [thread:$0]  %s299, 128, %s5, [#allocation5]
    $region37: #{tpu_custom_call.1} parent=1 // pred_fallthru
      _
    // Predicated region
    $region38: #{tpu_custom_call.1} parent=1 // pred_check
      _
    $region39: #{tpu_custom_call.1} parent=1 // pred_check_branch
      %303 = sbr.rel (0) target = $region41
    $region40: #{tpu_custom_call.1} parent=1 // pred_region
      %304 = dma.done [#allocation5], 128
    $region41: #{tpu_custom_call.1} parent=1 // pred_fallthru
      _
    %305 = vsyncpa [#allocation4], 1
    %306 = vsyncpa [#allocation7], 1
    %307 = vsyncpa [#allocation5], 1

// kernel: tpu_custom_call.1
$region0: #{tpu_custom_call.1}
  #allocation0 [shape = 'u32[]', space=smem, size = 0x4, offset = 0x4, fixed_abs, tag = 'smem constant byte address 0x4 - core index']
  #allocation1 [shape = 'u32[144,128]{1,0:T(1,128)}', space=vmem, size = 0x12000, scoped, tag = 'internal scratch']
  #allocation2 [shape = 'f32[8,128]{1,0:T(8,128)}', space=vmem, size = 0x1000, scoped, tag = 'scratch operand']
  %s0 = inlined_call_operand.hbm [shape: f32[8,128], index: 0, kind: input, shape index: {}]
  %s1 = inlined_call_operand.hbm [shape: bf16[128,128], index: 1, kind: input, shape index: {}]
  %s2 = inlined_call_operand.vmem [shape: f32[1,128], index: 2, kind: input, shape index: {}]
  %s3 = inlined_call_operand.hbm [shape: bf16[128,128], index: 3, kind: input, shape index: {}]
  %s4 = inlined_call_operand.vmem [shape: f32[1,128], index: 4, kind: input, shape index: {}]
  %s5 = inlined_call_operand.hbm [shape: f32[8,128], index: 5, kind: output, shape index: {}]
  %s6 = sld [smem:[#allocation0]]
  $region42: #{tpu_custom_call.1} parent=0
    _
  %s8 = ssub.s32 1, %s6
  %s9 = scalar_select 0, %s8, %s6
  $region1: #{tpu_custom_call.1} parent=0
    #allocation3 [shape = 'u8[4096]{0}', space=vmem, size = 0x1000, scoped, tag = 'input window, operand 0, single buffered']
    #allocation4 [shape = 's32[1]{0}', space=sflag, size = 0x4, scoped, tag = 'scoped memory for tpu_custom_call.1']
    #allocation5 [shape = 's32[1]{0}', space=sflag, size = 0x4, scoped, tag = 'scoped memory for tpu_custom_call.1']
    #allocation6 [shape = 'u8[32768]{0}', space=vmem, size = 0x8000, scoped, tag = 'input window, operand 1, single buffered']
    #allocation7 [shape = 's32[1]{0}', space=sflag, size = 0x4, scoped, tag = 'scoped memory for tpu_custom_call.1']
    #allocation8 [shape = 'u8[32768]{0}', space=vmem, size = 0x8000, scoped, tag = 'input window, operand 3, single buffered']
    #allocation9 [shape = 'u8[4096]{0}', space=vmem, size = 0x1000, scoped, tag = 'output window, operand 0, single buffered']
    %10 = vsyncpa [#allocation4], 0
    %11 = vsyncpa [#allocation7], 0
    %12 = vsyncpa [#allocation5], 0
    // Predicated region
    $region2: #{tpu_custom_call.1} parent=1 // pred_check
      _
    $region3: #{tpu_custom_call.1} parent=1 // pred_check_branch
      %14 = sbr.rel (0) target = $region5
    $region4: #{tpu_custom_call.1} parent=1 // pred_region
      %s16 = ssub.s32 128, 128
      %17 = vsyncadd [#allocation4], %s16
      %s19 = sshll.u32 [#allocation3], 4
      %s20 = int_to_ptr.vmem [resolvable:$true] %s19
      %22 = dma.hbm_to_vmem [thread:$0]  %s0, 128, %s20, [#allocation4]
    $region5: #{tpu_custom_call.1} parent=1 // pred_fallthru
      _
    // Predicated region
    $region6: #{tpu_custom_call.1} parent=1 // pred_check
      _
    $region7: #{tpu_custom_call.1} parent=1 // pred_check_branch
      %24 = sbr.rel (0) target = $region9
    $region8: #{tpu_custom_call.1} parent=1 // pred_region
      %s26 = ssub.s32 1024, 1024
      %27 = vsyncadd [#allocation7], %s26
      %s28 = sshll.u32 [#allocation6], 4
      %s29 = int_to_ptr.vmem [resolvable:$true] %s28
      %34 = dma.hbm_to_vmem [thread:$0]  %s1, 1024, %s29, [#allocation7], 64, 64, 4
    $region9: #{tpu_custom_call.1} parent=1 // pred_fallthru
      _
    // Predicated region
    $region10: #{tpu_custom_call.1} parent=1 // pred_check
      _
    $region11: #{tpu_custom_call.1} parent=1 // pred_check_branch
      %36 = sbr.rel (0) target = $region13
    $region12: #{tpu_custom_call.1} parent=1 // pred_region
      _
    $region13: #{tpu_custom_call.1} parent=1 // pred_fallthru
      _
    // Predicated region
    $region14: #{tpu_custom_call.1} parent=1 // pred_check
      _
    $region15: #{tpu_custom_call.1} parent=1 // pred_check_branch
      %38 = sbr.rel (0) target = $region17
    $region16: #{tpu_custom_call.1} parent=1 // pred_region
      %s40 = ssub.s32 1024, 1024
      %41 = vsyncadd [#allocation7], %s40
      %s42 = sshll.u32 [#allocation8], 4
      %s43 = int_to_ptr.vmem [resolvable:$true] %s42
      %48 = dma.hbm_to_vmem [thread:$0]  %s3, 1024, %s43, [#allocation7], 64, 64, 4
    $region17: #{tpu_custom_call.1} parent=1 // pred_fallthru
      _
    // Predicated region
    $region18: #{tpu_custom_call.1} parent=1 // pred_check
      _
    $region19: #{tpu_custom_call.1} parent=1 // pred_check_branch
      %50 = sbr.rel (0) target = $region21
    $region20: #{tpu_custom_call.1} parent=1 // pred_region
      _
    $region21: #{tpu_custom_call.1} parent=1 // pred_fallthru
      _
    // Predicated region
    $region22: #{tpu_custom_call.1} parent=1 // pred_check
      _
    $region23: #{tpu_custom_call.1} parent=1 // pred_check_branch
      %52 = sbr.rel (0) target = $region25
    $region24: #{tpu_custom_call.1} parent=1 // pred_region
      %53 = dma.done [#allocation4], 128
    $region25: #{tpu_custom_call.1} parent=1 // pred_fallthru
      _
    // Predicated region
    $region26: #{tpu_custom_call.1} parent=1 // pred_check
      _
    $region27: #{tpu_custom_call.1} parent=1 // pred_check_branch
      %55 = sbr.rel (0) target = $region29
    $region28: #{tpu_custom_call.1} parent=1 // pred_region
      %56 = dma.done [#allocation7], 1024
    $region29: #{tpu_custom_call.1} parent=1 // pred_fallthru
      _
    // Predicated region
    $region30: #{tpu_custom_call.1} parent=1 // pred_check
      _
    $region31: #{tpu_custom_call.1} parent=1 // pred_check_branch
      %58 = sbr.rel (0) target = $region33
    $region32: #{tpu_custom_call.1} parent=1 // pred_region
      %59 = dma.done [#allocation7], 1024
    $region33: #{tpu_custom_call.1} parent=1 // pred_fallthru
      _
    %v61 = vld [vmem:[#allocation3] sm:$0xff]
    %v62 = vpack.c.bf16 %v61, %v61
    %v63 = vld [vmem:[#allocation6] sm:$0xf]
    %v64 = vld [vmem:[#allocation6 + $0x4] sm:$0xf]
    %v65 = vld [vmem:[#allocation6 + $0x8] sm:$0xf]
    %v66 = vld [vmem:[#allocation6 + $0xc] sm:$0xf]
    %v67 = vld [vmem:[#allocation6 + $0x10] sm:$0xf]
    %v68 = vld [vmem:[#allocation6 + $0x14] sm:$0xf]
    %v69 = vld [vmem:[#allocation6 + $0x18] sm:$0xf]
    %v70 = vld [vmem:[#allocation6 + $0x1c] sm:$0xf]
    %v71 = vld [vmem:[#allocation6 + $0x20] sm:$0xf]
    %v72 = vld [vmem:[#allocation6 + $0x24] sm:$0xf]
    %v73 = vld [vmem:[#allocation6 + $0x28] sm:$0xf]
    %v74 = vld [vmem:[#allocation6 + $0x2c] sm:$0xf]
    %v75 = vld [vmem:[#allocation6 + $0x30] sm:$0xf]
    %v76 = vld [vmem:[#allocation6 + $0x34] sm:$0xf]
    %v77 = vld [vmem:[#allocation6 + $0x38] sm:$0xf]
    %v78 = vld [vmem:[#allocation6 + $0x3c] sm:$0xf]
    %v79 = vld [vmem:[%s2] sm:$0x1]
    %v81 = vlaneseq
    %v82 = vshrl.u32 %v81, 7
    %v83 = vsub.s32 0, %v82
    %v84 = vrot.slane %v79, %v83
    %v102 = vunpack.c.l.b16 %v63
    %v103 = vunpack.c.l.b16 %v64
    %v104 = vunpack.c.l.b16 %v65
    %v105 = vunpack.c.l.b16 %v66
    %v106 = vunpack.c.l.b16 %v67
    %v107 = vunpack.c.l.b16 %v68
    %v108 = vunpack.c.l.b16 %v69
    %v109 = vunpack.c.l.b16 %v70
    %v110 = vunpack.c.l.b16 %v71
    %v111 = vunpack.c.l.b16 %v72
    %v112 = vunpack.c.l.b16 %v73
    %v113 = vunpack.c.l.b16 %v74
    %v114 = vunpack.c.l.b16 %v75
    %v115 = vunpack.c.l.b16 %v76
    %v116 = vunpack.c.l.b16 %v77
    %v117 = vunpack.c.l.b16 %v78
    %v118 = vpack.c.b16 %v103, %v102
    %v119 = vpack.c.b16 %v105, %v104
    %v120 = vpack.c.b16 %v107, %v106
    %v121 = vpack.c.b16 %v109, %v108
    %v122 = vpack.c.b16 %v111, %v110
    %v123 = vpack.c.b16 %v113, %v112
    %v124 = vpack.c.b16 %v115, %v114
    %v125 = vpack.c.b16 %v117, %v116
    %134 = vmatprep.subr.bf16.mxu0 0
    %135 = vmatpush1.bf16.msra.mxu0 %v118
    %136 = vmatprep.subr.bf16.mxu0 0
    %137 = vmatpush1.bf16.msra.mxu0 %v119
    %138 = vmatprep.subr.bf16.mxu0 0
    %139 = vmatpush1.bf16.msra.mxu0 %v120
    %140 = vmatprep.subr.bf16.mxu0 0
    %141 = vmatpush1.bf16.msra.mxu0 %v121
    %142 = vmatprep.subr.bf16.mxu0 0
    %143 = vmatpush1.bf16.msra.mxu0 %v122
    %144 = vmatprep.subr.bf16.mxu0 0
    %145 = vmatpush1.bf16.msra.mxu0 %v123
    %146 = vmatprep.subr.bf16.mxu0 0
    %147 = vmatpush1.bf16.msra.mxu0 %v124
    %148 = vmatprep.subr.bf16.mxu0 0
    %149 = vmatpush1.bf16.msra.mxu0 %v125
    %150 = vmatprep.subr.bf16.mxu0 0
    %151 = vmatpush1.bf16.msra.mxu0 0
    %152 = vmatprep.subr.bf16.mxu0 0
    %153 = vmatpush1.bf16.msra.mxu0 0
    %154 = vmatprep.subr.bf16.mxu0 0
    %155 = vmatpush1.bf16.msra.mxu0 0
    %156 = vmatprep.subr.bf16.mxu0 0
    %157 = vmatpush1.bf16.msra.mxu0 0
    %158 = vmatprep.subr.bf16.mxu0 0
    %159 = vmatpush1.bf16.msra.mxu0 0
    %160 = vmatprep.subr.bf16.mxu0 0
    %161 = vmatpush1.bf16.msra.mxu0 0
    %162 = vmatprep.subr.bf16.mxu0 0
    %163 = vmatpush1.bf16.msra.mxu0 0
    %164 = vmatprep.subr.bf16.mxu0 0
    %165 = vmatpush1.bf16.msra.mxu0 0
    %166 = vmatprep.mubr.bf16.mxu0 0
    %167 = vmatmul.mubr.bf16.gmra.mrb[0].mxu0 %v62
    %v168 = vpop.f32.mrb[0].mxu0
    %v169 = vadd.f32 %v84, %v168
    %v170 = vpop.f32.mrb[0].mxu0
    %v171 = vpop.f32.mrb[0].mxu0
    %v172 = vpop.f32.mrb[0].mxu0
    %173 = vdwg.mxu0
    %v174 = vmul.f32 %v169, 0.5
    %v175 = vmul.f32 %v169, 0.70710677
    %v176 = verf.f32.pop %v175
    %v177 = vadd.f32 %v176, 1.0
    %v178 = vmul.f32 %v174, %v177
    %v179 = vpack.c.bf16 %v178, %v178
    %v180 = vld [vmem:[#allocation8] sm:$0xf]
    %v181 = vld [vmem:[#allocation8 + $0x4] sm:$0xf]
    %v182 = vld [vmem:[#allocation8 + $0x8] sm:$0xf]
    %v183 = vld [vmem:[#allocation8 + $0xc] sm:$0xf]
    %v184 = vld [vmem:[#allocation8 + $0x10] sm:$0xf]
    %v185 = vld [vmem:[#allocation8 + $0x14] sm:$0xf]
    %v186 = vld [vmem:[#allocation8 + $0x18] sm:$0xf]
    %v187 = vld [vmem:[#allocation8 + $0x1c] sm:$0xf]
    %v188 = vld [vmem:[#allocation8 + $0x20] sm:$0xf]
    %v189 = vld [vmem:[#allocation8 + $0x24] sm:$0xf]
    %v190 = vld [vmem:[#allocation8 + $0x28] sm:$0xf]
    %v191 = vld [vmem:[#allocation8 + $0x2c] sm:$0xf]
    %v192 = vld [vmem:[#allocation8 + $0x30] sm:$0xf]
    %v193 = vld [vmem:[#allocation8 + $0x34] sm:$0xf]
    %v194 = vld [vmem:[#allocation8 + $0x38] sm:$0xf]
    %v195 = vld [vmem:[#allocation8 + $0x3c] sm:$0xf]
    %v196 = vld [vmem:[%s4] sm:$0x1]
    %v198 = vlaneseq
    %v199 = vshrl.u32 %v198, 7
    %v200 = vsub.s32 0, %v199
    %v201 = vrot.slane %v196, %v200
    %v219 = vunpack.c.l.b16 %v180
    %v220 = vunpack.c.l.b16 %v181
    %v221 = vunpack.c.l.b16 %v182
    %v222 = vunpack.c.l.b16 %v183
    %v223 = vunpack.c.l.b16 %v184
    %v224 = vunpack.c.l.b16 %v185
    %v225 = vunpack.c.l.b16 %v186
    %v226 = vunpack.c.l.b16 %v187
    %v227 = vunpack.c.l.b16 %v188
    %v228 = vunpack.c.l.b16 %v189
    %v229 = vunpack.c.l.b16 %v190
    %v230 = vunpack.c.l.b16 %v191
    %v231 = vunpack.c.l.b16 %v192
    %v232 = vunpack.c.l.b16 %v193
    %v233 = vunpack.c.l.b16 %v194
    %v234 = vunpack.c.l.b16 %v195
    %v235 = vpack.c.b16 %v220, %v219
    %v236 = vpack.c.b16 %v222, %v221
    %v237 = vpack.c.b16 %v224, %v223
    %v238 = vpack.c.b16 %v226, %v225
    %v239 = vpack.c.b16 %v228, %v227
    %v240 = vpack.c.b16 %v230, %v229
    %v241 = vpack.c.b16 %v232, %v231
    %v242 = vpack.c.b16 %v234, %v233
    %251 = vmatprep.subr.bf16.mxu0 0
    %252 = vmatpush1.bf16.msra.mxu0 %v235
    %253 = vmatprep.subr.bf16.mxu0 0
    %254 = vmatpush1.bf16.msra.mxu0 %v236
    %255 = vmatprep.subr.bf16.mxu0 0
    %256 = vmatpush1.bf16.msra.mxu0 %v237
    %257 = vmatprep.subr.bf16.mxu0 0
    %258 = vmatpush1.bf16.msra.mxu0 %v238
    %259 = vmatprep.subr.bf16.mxu0 0
    %260 = vmatpush1.bf16.msra.mxu0 %v239
    %261 = vmatprep.subr.bf16.mxu0 0
    %262 = vmatpush1.bf16.msra.mxu0 %v240
    %263 = vmatprep.subr.bf16.mxu0 0
    %264 = vmatpush1.bf16.msra.mxu0 %v241
    %265 = vmatprep.subr.bf16.mxu0 0
    %266 = vmatpush1.bf16.msra.mxu0 %v242
    %267 = vmatprep.subr.bf16.mxu0 0
    %268 = vmatpush1.bf16.msra.mxu0 0
    %269 = vmatprep.subr.bf16.mxu0 0
    %270 = vmatpush1.bf16.msra.mxu0 0
    %271 = vmatprep.subr.bf16.mxu0 0
    %272 = vmatpush1.bf16.msra.mxu0 0
    %273 = vmatprep.subr.bf16.mxu0 0
    %274 = vmatpush1.bf16.msra.mxu0 0
    %275 = vmatprep.subr.bf16.mxu0 0
    %276 = vmatpush1.bf16.msra.mxu0 0
    %277 = vmatprep.subr.bf16.mxu0 0
    %278 = vmatpush1.bf16.msra.mxu0 0
    %279 = vmatprep.subr.bf16.mxu0 0
    %280 = vmatpush1.bf16.msra.mxu0 0
    %281 = vmatprep.subr.bf16.mxu0 0
    %282 = vmatpush1.bf16.msra.mxu0 0
    %283 = vmatprep.mubr.bf16.mxu0 0
    %284 = vmatmul.mubr.bf16.gmra.mrb[0].mxu0 %v179
    %v285 = vpop.f32.mrb[0].mxu0
    %v286 = vadd.f32 %v201, %v285
    %v287 = vpop.f32.mrb[0].mxu0
    %v288 = vpop.f32.mrb[0].mxu0
    %v289 = vpop.f32.mrb[0].mxu0
    %290 = vdwg.mxu0
    %291 = vst [vmem:[#allocation9] sm:$0xff] %v286
    // Predicated region
    $region34: #{tpu_custom_call.1} parent=1 // pred_check
      _
    $region35: #{tpu_custom_call.1} parent=1 // pred_check_branch
      %293 = sbr.rel (0) target = $region37
    $region36: #{tpu_custom_call.1} parent=1 // pred_region
      %s295 = ssub.s32 128, 128
      %296 = vsyncadd [#allocation5], %s295
      %s298 = sshll.u32 [#allocation9], 4
      %s299 = int_to_ptr.vmem [resolvable:$true] %s298
      %301 = dma.vmem_to_hbm [thread:$0]  %s299, 128, %s5, [#allocation5]
    $region37: #{tpu_custom_call.1} parent=1 // pred_fallthru
      _
    // Predicated region
    $region38: #{tpu_custom_call.1} parent=1 // pred_check
      _
    $region39: #{tpu_custom_call.1} parent=1 // pred_check_branch
      %303 = sbr.rel (0) target = $region41
    $region40: #{tpu_custom_call.1} parent=1 // pred_region
      %304 = dma.done [#allocation5], 128
    $region41: #{tpu_custom_call.1} parent=1 // pred_fallthru
      _
    %305 = vsyncpa [#allocation4], 1
    %306 = vsyncpa [#allocation7], 1
    %307 = vsyncpa [#allocation5], 1

</llo_original>
